<compile_context>
chip_gen: v6e
topology: v6e:2x2x1
jax: 0.10.0
libtpu: 0.0.40
codegen_flags: <defaults>
</compile_context>

<pallas_src>
import functools

import jax
import jax.numpy as jnp
from jax.experimental import pallas as pl
from jax.experimental.pallas import tpu as pltpu

D_IN, H1, H2, D_OUT = 4, 64, 32, 1


def _round_up(n, m):
    return ((n + m - 1) // m) * m


def mlp_kernel(xT_ref, w1_ref, b1_ref, w2_ref, b2_ref, w3c_ref, b3_ref, o_ref):
    # xT_ref: (D_IN, bm)  -- batch on lanes.
    x = xT_ref[...]

    # fc1: (64, 4) @ (4, bm) -> (64, bm); bias (64, 1) broadcasts across lanes.
    h = jnp.dot(w1_ref[...], x, preferred_element_type=jnp.float32)
    h = jnp.maximum(h + b1_ref[...], 0.0)

    # fc2: (32, 64) @ (64, bm) -> (32, bm).
    h = jnp.dot(w2_ref[...], h, preferred_element_type=jnp.float32)
    h = jnp.maximum(h + b2_ref[...], 0.0)

    # fc3: (1, 32) output -> VPU multiply + sublane reduce (no skinny MXU pass).
    # w3c_ref: (32, 1) column, broadcast-multiplied against (32, bm).
    y = jnp.sum(w3c_ref[...] * h, axis=0, keepdims=True)          # (1, bm)
    y = jnp.maximum(y + b3_ref[...], 0.0)

    o_ref[...] = y.astype(o_ref.dtype)


@functools.partial(jax.jit, static_argnames=("bm",))
def mlp_forward(x, w1, b1, w2, b2, w3, b3, *, bm=4096):
    """x: (B, 4) f32.  Weights in PyTorch layout: w (out, in), b (out,)."""
    B = x.shape[0]

    # Batch tile: multiple of 128 (lane width), clamped for small batches.
    bm = min(bm, _round_up(B, 128))
    Bp = _round_up(B, bm)
    grid = (Bp // bm,)

    # Wrapper-side layout plumbing (fused under jit): batch -> lanes.
    xT = x.T                                             # (D_IN, B)
    if Bp != B:
        xT = jnp.pad(xT, ((0, 0), (0, Bp - B)))          # pad batch with zeros

    b1c = b1.reshape(H1, 1)
    b2c = b2.reshape(H2, 1)
    w3c = w3.reshape(D_OUT, H2).T                        # (32, 1)
    b3c = b3.reshape(D_OUT, 1)                           # (1, 1)

    # Constant index_map -> block never changes -> stays resident in VMEM.
    rep = lambda shape: pl.BlockSpec(shape, lambda i: (0, 0))

    out = pl.pallas_call(
        mlp_kernel,
        out_shape=jax.ShapeDtypeStruct((D_OUT, Bp), jnp.float32),
        grid_spec=pltpu.PrefetchScalarGridSpec(
            num_scalar_prefetch=0,
            grid=grid,
            in_specs=[
                pl.BlockSpec((D_IN, bm), lambda i: (0, i)),   # x^T tile
                rep((H1, D_IN)),                              # W1 (64, 4)
                rep((H1, 1)),                                 # b1 (64, 1)
                rep((H2, H1)),                                # W2 (32, 64)
                rep((H2, 1)),                                 # b2 (32, 1)
                rep((H2, 1)),                                 # w3 column (32, 1)
                rep((D_OUT, 1)),                              # b3 (1, 1)
            ],
            out_specs=pl.BlockSpec((D_OUT, bm), lambda i: (0, i)),
        ),
        compiler_params=pltpu.CompilerParams(
            dimension_semantics=("parallel",)),
    )(xT, w1, b1c, w2, b2c, w3c, b3c)

    # (1, Bp) lane-dense slab -> PyTorch-shaped (B, 1) output.
    return out[0, :B].reshape(B, D_OUT)


def init_params(key):
    """Deterministic PyTorch-style init, stored in PyTorch layout (out, in)."""
    ks = jax.random.split(key, 6)

    def linear(kw, kb, fan_in, fan_out):
        bound = 1.0 / jnp.sqrt(fan_in)
        w = jax.random.uniform(kw, (fan_out, fan_in), jnp.float32, -bound, bound)
        b = jax.random.uniform(kb, (fan_out,), jnp.float32, -bound, bound)
        return w, b

    w1, b1 = linear(ks[0], ks[1], D_IN, H1)
    w2, b2 = linear(ks[2], ks[3], H1, H2)
    w3, b3 = linear(ks[4], ks[5], H2, D_OUT)
    return w1, b1, w2, b2, w3, b3


def reference_forward(x, w1, b1, w2, b2, w3, b3):
    h = jnp.maximum(x @ w1.T + b1, 0.0)
    h = jnp.maximum(h @ w2.T + b2, 0.0)
    return jnp.maximum(h @ w3.T + b3, 0.0)


if __name__ == "__main__":
    key = jax.random.PRNGKey(0)
    k_params, k_x = jax.random.split(key)

    params = init_params(k_params)

    # Small deterministic test batch (PyTorch forward takes (B, 4)).
    x = jax.random.normal(k_x, (8, D_IN), jnp.float32)

    out = mlp_forward(x, *params)
    out = jax.block_until_ready(out)

    ref = reference_forward(x, *params)
    assert out.shape == (8, D_OUT)
    assert jnp.allclose(out, ref, atol=1e-5, rtol=1e-5), "mismatch vs JAX reference"

    # A second, larger batch exercising multiple grid steps / padding path.
    x2 = jax.random.normal(jax.random.PRNGKey(1), (300, D_IN), jnp.float32)
    out2 = jax.block_until_ready(mlp_forward(x2, *params, bm=128))
    ref2 = reference_forward(x2, *params)
    assert out2.shape == (300, D_OUT)
    assert jnp.allclose(out2, ref2, atol=1e-5, rtol=1e-5), "mismatch vs JAX reference (padded)"

    print("KERNEL_OK")
</pallas_src>

<mosaic_0001>
module attributes {stable_mosaic.version = 11 : i64} {
  func.func @mlp_kernel(%arg0: i32, %arg1: memref<4x128xf32, #tpu.memory_space<vmem>>, %arg2: memref<64x4xf32, #tpu.memory_space<vmem>>, %arg3: memref<64x1xf32, #tpu.memory_space<vmem>>, %arg4: memref<32x64xf32, #tpu.memory_space<vmem>>, %arg5: memref<32x1xf32, #tpu.memory_space<vmem>>, %arg6: memref<32x1xf32, #tpu.memory_space<vmem>>, %arg7: memref<1x1xf32, #tpu.memory_space<vmem>>, %arg8: memref<1x128xf32, #tpu.memory_space<vmem>>) attributes {dimension_semantics = [#tpu.dimension_semantics<parallel>], iteration_bounds = array<i64: 1>, scalar_prefetch = 0 : i64, scratch_operands = 0 : i64, tpu.core_type = #tpu.core_type<tc>, window_params = [{transform_indices = @transform_0, window_bounds = array<i64: 4, 128>}, {pipeline_mode = #tpu.pipeline_mode<synchronous>, transform_indices = @transform_1, window_bounds = array<i64: 64, 4>}, {pipeline_mode = #tpu.pipeline_mode<synchronous>, transform_indices = @transform_2, window_bounds = array<i64: 64, 1>}, {pipeline_mode = #tpu.pipeline_mode<synchronous>, transform_indices = @transform_3, window_bounds = array<i64: 32, 64>}, {pipeline_mode = #tpu.pipeline_mode<synchronous>, transform_indices = @transform_4, window_bounds = array<i64: 32, 1>}, {pipeline_mode = #tpu.pipeline_mode<synchronous>, transform_indices = @transform_5, window_bounds = array<i64: 32, 1>}, {pipeline_mode = #tpu.pipeline_mode<synchronous>, transform_indices = @transform_6, window_bounds = array<i64: 1, 1>}, {transform_indices = @transform_7, window_bounds = array<i64: 1, 128>}]} {
    %c0 = arith.constant 0 : index
    %c0_0 = arith.constant 0 : index
    %0 = vector.load %arg1[%c0, %c0_0] : memref<4x128xf32, #tpu.memory_space<vmem>>, vector<4x128xf32>
    %c0_1 = arith.constant 0 : index
    %c0_2 = arith.constant 0 : index
    %1 = vector.load %arg2[%c0_1, %c0_2] : memref<64x4xf32, #tpu.memory_space<vmem>>, vector<64x4xf32>
    %cst = arith.constant dense<0.000000e+00> : vector<64x128xf32>
    %2 = tpu.matmul %1, %0, %cst {dimension_numbers = #tpu.dot_dimension_numbers<[1], [0], [0], [1], [0, 0, 1, 1], [], []>} : vector<64x4xf32>, vector<4x128xf32>, vector<64x128xf32> -> vector<64x128xf32>
    %c0_3 = arith.constant 0 : index
    %c0_4 = arith.constant 0 : index
    %3 = vector.load %arg3[%c0_3, %c0_4] : memref<64x1xf32, #tpu.memory_space<vmem>>, vector<64x1xf32>
    %4 = vector.broadcast %3 : vector<64x1xf32> to vector<64x128xf32>
    %5 = arith.addf %2, %4 : vector<64x128xf32>
    %cst_5 = arith.constant 0.000000e+00 : f32
    %6 = vector.broadcast %cst_5 : f32 to vector<64x128xf32>
    %7 = arith.maximumf %5, %6 : vector<64x128xf32>
    %c0_6 = arith.constant 0 : index
    %c0_7 = arith.constant 0 : index
    %8 = vector.load %arg4[%c0_6, %c0_7] : memref<32x64xf32, #tpu.memory_space<vmem>>, vector<32x64xf32>
    %cst_8 = arith.constant dense<0.000000e+00> : vector<32x128xf32>
    %9 = tpu.matmul %8, %7, %cst_8 {dimension_numbers = #tpu.dot_dimension_numbers<[1], [0], [0], [1], [0, 0, 1, 1], [], []>} : vector<32x64xf32>, vector<64x128xf32>, vector<32x128xf32> -> vector<32x128xf32>
    %c0_9 = arith.constant 0 : index
    %c0_10 = arith.constant 0 : index
    %10 = vector.load %arg5[%c0_9, %c0_10] : memref<32x1xf32, #tpu.memory_space<vmem>>, vector<32x1xf32>
    %11 = vector.broadcast %10 : vector<32x1xf32> to vector<32x128xf32>
    %12 = arith.addf %9, %11 : vector<32x128xf32>
    %cst_11 = arith.constant 0.000000e+00 : f32
    %13 = vector.broadcast %cst_11 : f32 to vector<32x128xf32>
    %14 = arith.maximumf %12, %13 : vector<32x128xf32>
    %c0_12 = arith.constant 0 : index
    %c0_13 = arith.constant 0 : index
    %15 = vector.load %arg6[%c0_12, %c0_13] : memref<32x1xf32, #tpu.memory_space<vmem>>, vector<32x1xf32>
    %16 = vector.broadcast %15 : vector<32x1xf32> to vector<32x128xf32>
    %17 = arith.mulf %16, %14 : vector<32x128xf32>
    %cst_14 = arith.constant dense<0.000000e+00> : vector<128xf32>
    %18 = vector.multi_reduction <add>, %17, %cst_14 [0] : vector<32x128xf32> to vector<128xf32>
    %19 = vector.shape_cast %18 : vector<128xf32> to vector<1x128xf32>
    %c0_15 = arith.constant 0 : index
    %c0_16 = arith.constant 0 : index
    %20 = vector.load %arg7[%c0_15, %c0_16] : memref<1x1xf32, #tpu.memory_space<vmem>>, vector<1x1xf32>
    %21 = vector.broadcast %20 : vector<1x1xf32> to vector<1x128xf32>
    %22 = arith.addf %19, %21 : vector<1x128xf32>
    %cst_17 = arith.constant 0.000000e+00 : f32
    %23 = vector.broadcast %cst_17 : f32 to vector<1x128xf32>
    %24 = arith.maximumf %22, %23 : vector<1x128xf32>
    %c0_18 = arith.constant 0 : index
    %c0_19 = arith.constant 0 : index
    %25 = vector.load %arg8[%c0_18, %c0_19] : memref<1x128xf32, #tpu.memory_space<vmem>>, vector<1x128xf32>
    tpu.vector_store %arg8[%c0_18, %c0_19], %24 {strides = array<i32>} : memref<1x128xf32, #tpu.memory_space<vmem>>, vector<1x128xf32>,
    return
  }
  func.func @transform_0(%arg0: i32) -> (i32, i32) {
    %c0_i32 = arith.constant 0 : i32
    %c0_i32_0 = arith.constant 0 : i32
    return %c0_i32, %arg0 : i32, i32
  }
  func.func @transform_1(%arg0: i32) -> (i32, i32) {
    %c0_i32 = arith.constant 0 : i32
    %c0_i32_0 = arith.constant 0 : i32
    %c0_i32_1 = arith.constant 0 : i32
    return %c0_i32, %c0_i32_0 : i32, i32
  }
  func.func @transform_2(%arg0: i32) -> (i32, i32) {
    %c0_i32 = arith.constant 0 : i32
    %c0_i32_0 = arith.constant 0 : i32
    %c0_i32_1 = arith.constant 0 : i32
    return %c0_i32, %c0_i32_0 : i32, i32
  }
  func.func @transform_3(%arg0: i32) -> (i32, i32) {
    %c0_i32 = arith.constant 0 : i32
    %c0_i32_0 = arith.constant 0 : i32
    %c0_i32_1 = arith.constant 0 : i32
    return %c0_i32, %c0_i32_0 : i32, i32
  }
  func.func @transform_4(%arg0: i32) -> (i32, i32) {
    %c0_i32 = arith.constant 0 : i32
    %c0_i32_0 = arith.constant 0 : i32
    %c0_i32_1 = arith.constant 0 : i32
    return %c0_i32, %c0_i32_0 : i32, i32
  }
  func.func @transform_5(%arg0: i32) -> (i32, i32) {
    %c0_i32 = arith.constant 0 : i32
    %c0_i32_0 = arith.constant 0 : i32
    %c0_i32_1 = arith.constant 0 : i32
    return %c0_i32, %c0_i32_0 : i32, i32
  }
  func.func @transform_6(%arg0: i32) -> (i32, i32) {
    %c0_i32 = arith.constant 0 : i32
    %c0_i32_0 = arith.constant 0 : i32
    %c0_i32_1 = arith.constant 0 : i32
    return %c0_i32, %c0_i32_0 : i32, i32
  }
  func.func @transform_7(%arg0: i32) -> (i32, i32) {
    %c0_i32 = arith.constant 0 : i32
    %c0_i32_0 = arith.constant 0 : i32
    return %c0_i32, %arg0 : i32, i32
  }
}

</mosaic_0001>

<llo_original>
// kernel: mlp_forward.1
$region0: #{mlp_forward.1}
  #allocation0 [shape = 'u32[]', space=smem, size = 0x4, offset = 0x4, fixed_abs, tag = 'smem constant byte address 0x4 - core index']
  #allocation1 [shape = 'u32[144,128]{1,0:T(1,128)}', space=vmem, size = 0x12000, scoped, tag = 'internal scratch']
  #allocation2 [shape = 'f32[1,1]{1,0:T(1,128)S(1)}', space=vmem, size = 0x200, scoped, tag = 'scoped memory for mlp_forward.1']
  %s0 = inlined_call_operand.vmem [shape: f32[4,128], index: 0, kind: input, shape index: {}]
  %s1 = inlined_call_operand.vmem [shape: f32[64,4], index: 1, kind: input, shape index: {}]
  %s2 = inlined_call_operand.vmem [shape: f32[64,1], index: 2, kind: input, shape index: {}]
  %s3 = inlined_call_operand.vmem [shape: f32[32,64], index: 3, kind: input, shape index: {}]
  %s4 = inlined_call_operand.vmem [shape: f32[32,1], index: 4, kind: input, shape index: {}]
  %s5 = inlined_call_operand.vmem [shape: f32[32,1], index: 5, kind: input, shape index: {}]
  %s6 = inlined_call_operand.<no memory space> [shape: f32[1,1], index: 6, kind: input, shape index: {}]
  %s7 = inlined_call_operand.vmem [shape: f32[1,128], index: 7, kind: output, shape index: {}]
  %s8 = sld [smem:[#allocation0]]
  $region38: #{mlp_forward.1} parent=0
    _
  %s10 = ssub.s32 1, %s8
  %s11 = scalar_select 0, %s10, %s8
  %v12 = vstv %s6
  %13 = vst [vmem:[#allocation2] sm:$0x1] %v12
  // Predicated region
  $region2: #{mlp_forward.1} parent=0 // pred_check
    _
  $region3: #{mlp_forward.1} parent=0 // pred_check_branch
    %15 = sbr.rel (0) target = $region5
  $region4: #{mlp_forward.1} parent=0 // pred_region
    _
  $region5: #{mlp_forward.1} parent=0 // pred_fallthru
    _
  // Predicated region
  $region6: #{mlp_forward.1} parent=0 // pred_check
    _
  $region7: #{mlp_forward.1} parent=0 // pred_check_branch
    %17 = sbr.rel (0) target = $region9
  $region8: #{mlp_forward.1} parent=0 // pred_region
    _
  $region9: #{mlp_forward.1} parent=0 // pred_fallthru
    _
  // Predicated region
  $region10: #{mlp_forward.1} parent=0 // pred_check
    _
  $region11: #{mlp_forward.1} parent=0 // pred_check_branch
    %19 = sbr.rel (0) target = $region13
  $region12: #{mlp_forward.1} parent=0 // pred_region
    _
  $region13: #{mlp_forward.1} parent=0 // pred_fallthru
    _
  // Predicated region
  $region14: #{mlp_forward.1} parent=0 // pred_check
    _
  $region15: #{mlp_forward.1} parent=0 // pred_check_branch
    %21 = sbr.rel (0) target = $region17
  $region16: #{mlp_forward.1} parent=0 // pred_region
    _
  $region17: #{mlp_forward.1} parent=0 // pred_fallthru
    _
  // Predicated region
  $region18: #{mlp_forward.1} parent=0 // pred_check
    _
  $region19: #{mlp_forward.1} parent=0 // pred_check_branch
    %23 = sbr.rel (0) target = $region21
  $region20: #{mlp_forward.1} parent=0 // pred_region
    _
  $region21: #{mlp_forward.1} parent=0 // pred_fallthru
    _
  // Predicated region
  $region22: #{mlp_forward.1} parent=0 // pred_check
    _
  $region23: #{mlp_forward.1} parent=0 // pred_check_branch
    %25 = sbr.rel (0) target = $region25
  $region24: #{mlp_forward.1} parent=0 // pred_region
    _
  $region25: #{mlp_forward.1} parent=0 // pred_fallthru
    _
  // Predicated region
  $region26: #{mlp_forward.1} parent=0 // pred_check
    _
  $region27: #{mlp_forward.1} parent=0 // pred_check_branch
    %27 = sbr.rel (0) target = $region29
  $region28: #{mlp_forward.1} parent=0 // pred_region
    _
  $region29: #{mlp_forward.1} parent=0 // pred_fallthru
    _
  %v28 = vld [vmem:[%s0] sm:$0xf]
  %v29 = vld [vmem:[%s1] sm:$0xff]
  %v30 = vld [vmem:[%s1 + $0x8] sm:$0xff]
  %v31 = vld [vmem:[%s1 + $0x10] sm:$0xff]
  %v32 = vld [vmem:[%s1 + $0x18] sm:$0xff]
  %v33 = vld [vmem:[%s1 + $0x20] sm:$0xff]
  %v34 = vld [vmem:[%s1 + $0x28] sm:$0xff]
  %v35 = vld [vmem:[%s1 + $0x30] sm:$0xff]
  %v36 = vld [vmem:[%s1 + $0x38] sm:$0xff]
  %v37 = vld [vmem:[%s2] sm:$0xff]
  %v38 = vld [vmem:[%s2 + $0x8] sm:$0xff]
  %v39 = vld [vmem:[%s2 + $0x10] sm:$0xff]
  %v40 = vld [vmem:[%s2 + $0x18] sm:$0xff]
  %v41 = vld [vmem:[%s2 + $0x20] sm:$0xff]
  %v42 = vld [vmem:[%s2 + $0x28] sm:$0xff]
  %v43 = vld [vmem:[%s2 + $0x30] sm:$0xff]
  %v44 = vld [vmem:[%s2 + $0x38] sm:$0xff]
  %46 = vset.pattern.permute.xlu0 0
  %47 = vperm.xlu0 %46, %v37
  %v48 = vpop.permute.xlu0 %47
  %51 = vset.pattern.permute.xlu0 0
  %52 = vperm.xlu0 %51, %v38
  %v53 = vpop.permute.xlu0 %52
  %56 = vset.pattern.permute.xlu0 0
  %57 = vperm.xlu0 %56, %v39
  %v58 = vpop.permute.xlu0 %57
  %61 = vset.pattern.permute.xlu0 0
  %62 = vperm.xlu0 %61, %v40
  %v63 = vpop.permute.xlu0 %62
  %66 = vset.pattern.permute.xlu0 0
  %67 = vperm.xlu0 %66, %v41
  %v68 = vpop.permute.xlu0 %67
  %71 = vset.pattern.permute.xlu0 0
  %72 = vperm.xlu0 %71, %v42
  %v73 = vpop.permute.xlu0 %72
  %76 = vset.pattern.permute.xlu0 0
  %77 = vperm.xlu0 %76, %v43
  %v78 = vpop.permute.xlu0 %77
  %81 = vset.pattern.permute.xlu0 0
  %82 = vperm.xlu0 %81, %v44
  %v83 = vpop.permute.xlu0 %82
  %vm85 = vcmask 31744
  %v87 = vsel %vm85, %v29, 0
  %v90 = vsel %vm85, %v30, 0
  %v93 = vsel %vm85, %v31, 0
  %v96 = vsel %vm85, %v32, 0
  %v99 = vsel %vm85, %v33, 0
  %v102 = vsel %vm85, %v34, 0
  %v105 = vsel %vm85, %v35, 0
  %v108 = vsel %vm85, %v36, 0
  %vm110 = vcmask 1043456
  %v112 = vsel %vm110, %v28, 0
  %114 = vmatprep.subr.mxu0 0.0
  %115 = vmatpush1.msra.mxu0 0.0
  %116 = vmatprep.subr.mxu0 0.0
  %117 = vmatpush1.msra.mxu0 0.0
  %118 = vmatprep.subr.mxu0 0.0
  %119 = vmatpush1.msra.mxu0 0.0
  %120 = vmatprep.subr.mxu0 0.0
  %121 = vmatpush1.msra.mxu0 0.0
  %122 = vmatprep.subr.mxu0 0.0
  %123 = vmatpush1.msra.mxu0 0.0
  %124 = vmatprep.subr.mxu0 0.0
  %125 = vmatpush1.msra.mxu0 0.0
  %126 = vmatprep.subr.mxu0 0.0
  %127 = vmatpush1.msra.mxu0 0.0
  %128 = vmatprep.subr.mxu0 0.0
  %129 = vmatpush1.msra.mxu0 0.0
  %130 = vmatprep.subr.mxu0 0.0
  %131 = vmatpush1.msra.mxu0 0.0
  %132 = vmatprep.subr.mxu0 0.0
  %133 = vmatpush1.msra.mxu0 0.0
  %134 = vmatprep.subr.mxu0 0.0
  %135 = vmatpush1.msra.mxu0 0.0
  %136 = vmatprep.subr.mxu0 0.0
  %137 = vmatpush1.msra.mxu0 0.0
  %138 = vmatprep.subr.mxu0 0.0
  %139 = vmatpush1.msra.mxu0 0.0
  %140 = vmatprep.subr.mxu0 0.0
  %141 = vmatpush1.msra.mxu0 0.0
  %142 = vmatprep.subr.mxu0 0.0
  %143 = vmatpush1.msra.mxu0 0.0
  %144 = vmatprep.subr.mxu0 0.0
  %145 = vmatpush1.msra.mxu0 %v112
  %146 = vmatprep.subr.mxu0 0.0
  %147 = vmatpush2.msra.mxu0 0.0
  %148 = vmatprep.subr.mxu0 0.0
  %149 = vmatpush2.msra.mxu0 0.0
  %150 = vmatprep.subr.mxu0 0.0
  %151 = vmatpush2.msra.mxu0 0.0
  %152 = vmatprep.subr.mxu0 0.0
  %153 = vmatpush2.msra.mxu0 0.0
  %154 = vmatprep.subr.mxu0 0.0
  %155 = vmatpush2.msra.mxu0 0.0
  %156 = vmatprep.subr.mxu0 0.0
  %157 = vmatpush2.msra.mxu0 0.0
  %158 = vmatprep.subr.mxu0 0.0
  %159 = vmatpush2.msra.mxu0 0.0
  %160 = vmatprep.subr.mxu0 0.0
  %161 = vmatpush2.msra.mxu0 0.0
  %162 = vmatprep.subr.mxu0 0.0
  %163 = vmatpush2.msra.mxu0 0.0
  %164 = vmatprep.subr.mxu0 0.0
  %165 = vmatpush2.msra.mxu0 0.0
  %166 = vmatprep.subr.mxu0 0.0
  %167 = vmatpush2.msra.mxu0 0.0
  %168 = vmatprep.subr.mxu0 0.0
  %169 = vmatpush2.msra.mxu0 0.0
  %170 = vmatprep.subr.mxu0 0.0
  %171 = vmatpush2.msra.mxu0 0.0
  %172 = vmatprep.subr.mxu0 0.0
  %173 = vmatpush2.msra.mxu0 0.0
  %174 = vmatprep.subr.mxu0 0.0
  %175 = vmatpush2.msra.mxu0 0.0
  %176 = vmatprep.subr.mxu0 0.0
  %177 = vmatpush2.msra.mxu0 0.0
  %178 = vmatprep.mubr.f32.mxu0 0.0
  %179 = vmatmul.mubr.f32.gmra.mxu0 %v87
  %v180 = vpop.f32.mrf.mxu0
  %v181 = vadd.f32 %v48, %v180
  %v182 = vpop.f32.mrf.mxu0
  %183 = vmatprep.mubr.f32.mxu0 0.0
  %184 = vmatmul.mubr.f32.gmra.mxu0 %v90
  %v185 = vpop.f32.mrf.mxu0
  %v186 = vadd.f32 %v53, %v185
  %v187 = vpop.f32.mrf.mxu0
  %188 = vmatprep.mubr.f32.mxu0 0.0
  %189 = vmatmul.mubr.f32.gmra.mxu0 %v93
  %v190 = vpop.f32.mrf.mxu0
  %v191 = vadd.f32 %v58, %v190
  %v192 = vpop.f32.mrf.mxu0
  %193 = vmatprep.mubr.f32.mxu0 0.0
  %194 = vmatmul.mubr.f32.gmra.mxu0 %v96
  %v195 = vpop.f32.mrf.mxu0
  %v196 = vadd.f32 %v63, %v195
  %v197 = vpop.f32.mrf.mxu0
  %198 = vmatprep.mubr.f32.mxu0 0.0
  %199 = vmatmul.mubr.f32.gmra.mxu0 %v99
  %v200 = vpop.f32.mrf.mxu0
  %v201 = vadd.f32 %v68, %v200
  %v202 = vpop.f32.mrf.mxu0
  %203 = vmatprep.mubr.f32.mxu0 0.0
  %204 = vmatmul.mubr.f32.gmra.mxu0 %v102
  %v205 = vpop.f32.mrf.mxu0
  %v206 = vadd.f32 %v73, %v205
  %v207 = vpop.f32.mrf.mxu0
  %208 = vmatprep.mubr.f32.mxu0 0.0
  %209 = vmatmul.mubr.f32.gmra.mxu0 %v105
  %v210 = vpop.f32.mrf.mxu0
  %v211 = vadd.f32 %v78, %v210
  %v212 = vpop.f32.mrf.mxu0
  %213 = vmatprep.mubr.f32.mxu0 0.0
  %214 = vmatmul.mubr.f32.gmra.mxu0 %v108
  %v215 = vpop.f32.mrf.mxu0
  %v216 = vadd.f32 %v83, %v215
  %v217 = vpop.f32.mrf.mxu0
  %218 = vdwg.mxu0
  %v219 = vmax.f32 %v181, 0.0
  %v220 = vmax.f32 %v186, 0.0
  %v221 = vmax.f32 %v191, 0.0
  %v222 = vmax.f32 %v196, 0.0
  %v223 = vmax.f32 %v201, 0.0
  %v224 = vmax.f32 %v206, 0.0
  %v225 = vmax.f32 %v211, 0.0
  %v226 = vmax.f32 %v216, 0.0
  %v227 = vld [vmem:[%s3] sm:$0xff]
  %v228 = vld [vmem:[%s3 + $0x8] sm:$0xff]
  %v229 = vld [vmem:[%s3 + $0x10] sm:$0xff]
  %v230 = vld [vmem:[%s3 + $0x18] sm:$0xff]
  %v231 = vld [vmem:[%s4] sm:$0xff]
  %v232 = vld [vmem:[%s4 + $0x8] sm:$0xff]
  %v233 = vld [vmem:[%s4 + $0x10] sm:$0xff]
  %v234 = vld [vmem:[%s4 + $0x18] sm:$0xff]
  %236 = vset.pattern.permute.xlu0 0
  %237 = vperm.xlu0 %236, %v231
  %v238 = vpop.permute.xlu0 %237
  %241 = vset.pattern.permute.xlu0 0
  %242 = vperm.xlu0 %241, %v232
  %v243 = vpop.permute.xlu0 %242
  %246 = vset.pattern.permute.xlu0 0
  %247 = vperm.xlu0 %246, %v233
  %v248 = vpop.permute.xlu0 %247
  %251 = vset.pattern.permute.xlu0 0
  %252 = vperm.xlu0 %251, %v234
  %v253 = vpop.permute.xlu0 %252
  %vm255 = vcmask 523264
  %v257 = vsel %vm255, %v227, 0
  %v260 = vsel %vm255, %v228, 0
  %v263 = vsel %vm255, %v229, 0
  %v266 = vsel %vm255, %v230, 0
  %268 = vmatprep.subr.mxu0 0.0
  %269 = vmatpush1.msra.mxu0 0.0
  %270 = vmatprep.subr.mxu0 0.0
  %271 = vmatpush1.msra.mxu0 0.0
  %272 = vmatprep.subr.mxu0 0.0
  %273 = vmatpush1.msra.mxu0 0.0
  %274 = vmatprep.subr.mxu0 0.0
  %275 = vmatpush1.msra.mxu0 0.0
  %276 = vmatprep.subr.mxu0 0.0
  %277 = vmatpush1.msra.mxu0 0.0
  %278 = vmatprep.subr.mxu0 0.0
  %279 = vmatpush1.msra.mxu0 0.0
  %280 = vmatprep.subr.mxu0 0.0
  %281 = vmatpush1.msra.mxu0 0.0
  %282 = vmatprep.subr.mxu0 0.0
  %283 = vmatpush1.msra.mxu0 0.0
  %284 = vmatprep.subr.mxu0 0.0
  %285 = vmatpush1.msra.mxu0 %v226
  %286 = vmatprep.subr.mxu0 0.0
  %287 = vmatpush1.msra.mxu0 %v225
  %288 = vmatprep.subr.mxu0 0.0
  %289 = vmatpush1.msra.mxu0 %v224
  %290 = vmatprep.subr.mxu0 0.0
  %291 = vmatpush1.msra.mxu0 %v223
  %292 = vmatprep.subr.mxu0 0.0
  %293 = vmatpush1.msra.mxu0 %v222
  %294 = vmatprep.subr.mxu0 0.0
  %295 = vmatpush1.msra.mxu0 %v221
  %296 = vmatprep.subr.mxu0 0.0
  %297 = vmatpush1.msra.mxu0 %v220
  %298 = vmatprep.subr.mxu0 0.0
  %299 = vmatpush1.msra.mxu0 %v219
  %300 = vmatprep.subr.mxu0 0.0
  %301 = vmatpush2.msra.mxu0 0.0
  %302 = vmatprep.subr.mxu0 0.0
  %303 = vmatpush2.msra.mxu0 0.0
  %304 = vmatprep.subr.mxu0 0.0
  %305 = vmatpush2.msra.mxu0 0.0
  %306 = vmatprep.subr.mxu0 0.0
  %307 = vmatpush2.msra.mxu0 0.0
  %308 = vmatprep.subr.mxu0 0.0
  %309 = vmatpush2.msra.mxu0 0.0
  %310 = vmatprep.subr.mxu0 0.0
  %311 = vmatpush2.msra.mxu0 0.0
  %312 = vmatprep.subr.mxu0 0.0
  %313 = vmatpush2.msra.mxu0 0.0
  %314 = vmatprep.subr.mxu0 0.0
  %315 = vmatpush2.msra.mxu0 0.0
  %316 = vmatprep.subr.mxu0 0.0
  %317 = vmatpush2.msra.mxu0 0.0
  %318 = vmatprep.subr.mxu0 0.0
  %319 = vmatpush2.msra.mxu0 0.0
  %320 = vmatprep.subr.mxu0 0.0
  %321 = vmatpush2.msra.mxu0 0.0
  %322 = vmatprep.subr.mxu0 0.0
  %323 = vmatpush2.msra.mxu0 0.0
  %324 = vmatprep.subr.mxu0 0.0
  %325 = vmatpush2.msra.mxu0 0.0
  %326 = vmatprep.subr.mxu0 0.0
  %327 = vmatpush2.msra.mxu0 0.0
  %328 = vmatprep.subr.mxu0 0.0
  %329 = vmatpush2.msra.mxu0 0.0
  %330 = vmatprep.subr.mxu0 0.0
  %331 = vmatpush2.msra.mxu0 0.0
  %332 = vmatprep.mubr.f32.mxu0 0.0
  %333 = vmatmul.mubr.f32.gmra.mxu0 %v257
  %v334 = vpop.f32.mrf.mxu0
  %v335 = vadd.f32 %v238, %v334
  %v336 = vpop.f32.mrf.mxu0
  %337 = vmatprep.mubr.f32.mxu0 0.0
  %338 = vmatmul.mubr.f32.gmra.mxu0 %v260
  %v339 = vpop.f32.mrf.mxu0
  %v340 = vadd.f32 %v243, %v339
  %v341 = vpop.f32.mrf.mxu0
  %342 = vmatprep.mubr.f32.mxu0 0.0
  %343 = vmatmul.mubr.f32.gmra.mxu0 %v263
  %v344 = vpop.f32.mrf.mxu0
  %v345 = vadd.f32 %v248, %v344
  %v346 = vpop.f32.mrf.mxu0
  %347 = vmatprep.mubr.f32.mxu0 0.0
  %348 = vmatmul.mubr.f32.gmra.mxu0 %v266
  %v349 = vpop.f32.mrf.mxu0
  %v350 = vadd.f32 %v253, %v349
  %v351 = vpop.f32.mrf.mxu0
  %352 = vdwg.mxu0
  %v353 = vmax.f32 %v335, 0.0
  %v354 = vmax.f32 %v340, 0.0
  %v355 = vmax.f32 %v345, 0.0
  %v356 = vmax.f32 %v350, 0.0
  %v357 = vld [vmem:[%s5] sm:$0xff]
  %v358 = vld [vmem:[%s5 + $0x8] sm:$0xff]
  %v359 = vld [vmem:[%s5 + $0x10] sm:$0xff]
  %v360 = vld [vmem:[%s5 + $0x18] sm:$0xff]
  %362 = vset.pattern.permute.xlu0 0
  %363 = vperm.xlu0 %362, %v357
  %v364 = vpop.permute.xlu0 %363
  %367 = vset.pattern.permute.xlu0 0
  %368 = vperm.xlu0 %367, %v358
  %v369 = vpop.permute.xlu0 %368
  %372 = vset.pattern.permute.xlu0 0
  %373 = vperm.xlu0 %372, %v359
  %v374 = vpop.permute.xlu0 %373
  %377 = vset.pattern.permute.xlu0 0
  %378 = vperm.xlu0 %377, %v360
  %v379 = vpop.permute.xlu0 %378
  %v381 = vmul.f32 %v364, %v353
  %v382 = vmul.f32 %v369, %v354
  %v383 = vmul.f32 %v374, %v355
  %v384 = vmul.f32 %v379, %v356
  %v385 = vadd.f32 %v381, %v382
  %v386 = vadd.f32 %v385, %v383
  %v387 = vadd.f32 %v386, %v384
  %v388 = vrot.slane %v387, 4
  %v389 = vadd.f32 %v387, %v388
  %v390 = vrot.slane %v389, 2
  %v391 = vadd.f32 %v389, %v390
  %v392 = vrot.slane %v391, 1
  %v393 = vadd.f32 %v391, %v392
  %v394 = vld [vmem:[#allocation2] sm:$0x1]
  %396 = vset.pattern.permute.xlu0 0
  %397 = vperm.xlu0 %396, %v394
  %v398 = vpop.permute.xlu0 %397
  %v400 = vlaneseq
  %v401 = vshrl.u32 %v400, 7
  %v402 = vsub.s32 0, %v401
  %v403 = vrot.slane %v398, %v402
  %v404 = vadd.f32 %v393, %v403
  %v405 = vmax.f32 %v404, 0.0
  %406 = vst [vmem:[%s7] sm:$0x1] %v405
  // Predicated region
  $region30: #{mlp_forward.1} parent=0 // pred_check
    _
  $region31: #{mlp_forward.1} parent=0 // pred_check_branch
    %408 = sbr.rel (0) target = $region33
  $region32: #{mlp_forward.1} parent=0 // pred_region
    _
  $region33: #{mlp_forward.1} parent=0 // pred_fallthru
    _
  // Predicated region
  $region34: #{mlp_forward.1} parent=0 // pred_check
    _
  $region35: #{mlp_forward.1} parent=0 // pred_check_branch
    %410 = sbr.rel (0) target = $region37
  $region36: #{mlp_forward.1} parent=0 // pred_region
    _
  $region37: #{mlp_forward.1} parent=0 // pred_fallthru
    _

</llo_original>
